<compile_context>
chip_gen: v5e
topology: v5e:2x2
jax: 0.10.0
libtpu: 0.0.40
codegen_flags: <defaults>
</compile_context>

<pallas_src>
import functools

import jax
import jax.numpy as jnp
from jax import lax
from jax.experimental import pallas as pl
from jax.experimental.pallas import tpu as pltpu


def _round_up(x, m):
    return (x + m - 1) // m * m


def _cdiv(a, b):
    return -(-a // b)


def _pack_geometry(h_dim):
    """Lane-group geometry: pack G nodes of width g_width into 128 lanes."""
    if h_dim >= 128:
        g_width = _round_up(h_dim, 128)
        G = 1
    else:
        g_width = pl.next_power_of_2(h_dim)   # divides 128
        G = 128 // g_width
    Hp = G * g_width                          # = 128 whenever h_dim <= 128
    return g_width, G, Hp


def _attention_kernel(
    h_t_ref,     # (tile_b, Hp)   query block, h_t in lanes [0, h_dim)
    nodes_ref,   # (tile_nr, Hp)  packed nodes, G nodes per 128-lane row
    w0_ref,      # (Hp, Hp)       W0 replicated across lane-group columns
    b0_ref,      # (1, Hp)        b0 replicated across lane groups
    w1_ref,      # (Hp, Hp)       W1 in [:h_dim, :h_dim], zero elsewhere
    w2_ref,      # (Hp, Hp)       W2 in [:h_dim, :h_dim], zero elsewhere
    b12_ref,     # (1, Hp)        b1 + b2 (pre-summed)
    out_ref,     # (tile_b, Hp)
    q_scr,       # VMEM (tile_b, Hp)  q = W0 h_t + b0, replicated per lane group
    acc_scr,     # VMEM (tile_b, Hp)  packed (per-group) partial e_s
    *, g_width, chunk, n_chunks,
):
    nb = pl.program_id(1)
    tile_b, Hp = q_scr.shape

    @pl.when(nb == 0)
    def _init():
        # W0/b0 were replicated across lane-group columns at prep time, so
        # this single matmul directly produces q tiled across the G groups.
        q_scr[...] = (
            jnp.dot(h_t_ref[...], w0_ref[...], preferred_element_type=jnp.float32)
            + b0_ref[...]
        )
        acc_scr[...] = jnp.zeros_like(acc_scr)

    # e_s accumulation.  Zero-padded node rows / lanes contribute h*exp(h*q)=0,
    # so no masking is needed.  Note: exp() is unstabilized (matches the
    # reference semantics); activations are assumed to stay O(1)-ish.
    for b0 in range(0, tile_b, 8):            # 8-row groups -> aligned full-vreg RMWs
        contribs = []
        for db in range(8):                   # small static unroll (8 rows)
            b = b0 + db
            # Hoist the q-row load + broadcast out of the hot node loop.
            q_b = jnp.broadcast_to(q_scr[pl.ds(b, 1), :], (chunk, Hp))

            if n_chunks == 1:
                h = nodes_ref[...]
                part = h * jnp.exp(h * q_b)
            else:
                def chunk_body(c, part, q_b=q_b):
                    start = pl.multiple_of(c * chunk, chunk)
                    h = nodes_ref[pl.ds(start, chunk), :]
                    return part + h * jnp.exp(h * q_b)

                part = lax.fori_loop(
                    0, n_chunks, chunk_body,
                    jnp.zeros((chunk, Hp), jnp.float32))

            contribs.append(jnp.sum(part, axis=0, keepdims=True))   # (1, Hp)

        # ONE full-tile accumulator update per 8-row group per grid step
        # (no per-row masked sub-(8,128) loads/stores).
        acc_scr[pl.ds(b0, 8), :] += jnp.concatenate(contribs, axis=0)

    @pl.when(nb == pl.num_programs(1) - 1)
    def _finalize():
        es = acc_scr[...]
        # Combine the G lane groups: after log2(G) roll+add steps (XLU slot,
        # essentially free) every group holds the full e_s.  W1 rows past
        # h_dim are zero, so the extra copies are inert in the matmul.
        s = Hp // 2
        while s >= g_width:
            es = es + pltpu.roll(es, shift=s, axis=1)
            s //= 2
        # Two dots instead of concat + one dot (avoids a lane-concat relayout).
        pre = (
            jnp.dot(es, w1_ref[...], preferred_element_type=jnp.float32)
            + jnp.dot(h_t_ref[...], w2_ref[...], preferred_element_type=jnp.float32)
            + b12_ref[...]
        )
        out_ref[...] = jnp.tanh(pre).astype(out_ref.dtype)


def prepare_attention_params(params, h_dim):
    """One-time weight padding / replication / bias fusion (hoisted out of the
    per-call path).  Weights are in (in, out) layout."""
    g_width, G, Hp = _pack_geometry(h_dim)
    f32 = jnp.float32

    w0 = params["w0"].astype(f32)
    b0 = params["b0"].astype(f32)
    w1 = params["w1"].astype(f32)
    b1 = params["b1"].astype(f32)
    w2 = params["w2"].astype(f32)
    b2 = params["b2"].astype(f32)

    # W0 / b0 replicated across lane-group columns so the in-kernel matmul
    # directly produces q tiled G-fold across the 128 lanes.
    w0_rep = jnp.zeros((Hp, Hp), f32)
    b0_rep = jnp.zeros((1, Hp), f32)
    for g in range(G):
        c0 = g * g_width
        w0_rep = w0_rep.at[:h_dim, c0:c0 + h_dim].set(w0)
        b0_rep = b0_rep.at[:, c0:c0 + h_dim].set(b0)

    w1p = jnp.zeros((Hp, Hp), f32).at[:h_dim, :h_dim].set(w1)
    w2p = jnp.zeros((Hp, Hp), f32).at[:h_dim, :h_dim].set(w2)
    b12 = jnp.zeros((1, Hp), f32).at[:, :h_dim].set(b1 + b2)

    return {
        "w0_rep": w0_rep, "b0_rep": b0_rep,
        "w1p": w1p, "w2p": w2p, "b12": b12,
        "h_dim": h_dim, "g_width": g_width, "G": G, "Hp": Hp,
    }


def attention_forward(h_nodes, h_t, prep, *, tile_b=8, max_node_rows_per_tile=4096):
    """Batched Attention step.

    h_nodes: (N, h_dim)  hidden states of the nodes visited by the tree walk
    h_t:     (B, h_dim)  query hidden state(s)
    prep:    output of prepare_attention_params()
    Returns  e_t: (B, h_dim)
    """
    assert tile_b % 8 == 0, "tile_b must be a multiple of 8 (sublane alignment)"
    h_dim = prep["h_dim"]
    g_width, G, Hp = prep["g_width"], prep["G"], prep["Hp"]

    B = h_t.shape[0]
    N = h_nodes.shape[0]
    f32 = jnp.float32

    Bp = _round_up(B, tile_b)

    # Packed node-row count and node tiling (tile is a multiple of the
    # in-kernel 128-row chunk once it exceeds one chunk).
    NR0 = max(_cdiv(N, G), 1)
    if NR0 <= 128:
        tile_nr = _round_up(NR0, 8)
    else:
        tile_nr = min(_round_up(NR0, 128), max_node_rows_per_tile)
    NR = _round_up(NR0, tile_nr)
    chunk = min(128, tile_nr)
    n_chunks = tile_nr // chunk

    # Pack G nodes per 128-lane row.  Zero padding is semantics-preserving:
    # padded node rows / feature lanes contribute h * exp(h*q) = 0, and padded
    # output rows/lanes are sliced off.
    nodes_pad = jnp.zeros((NR * G, g_width), f32).at[:N, :h_dim].set(h_nodes.astype(f32))
    nodes_packed = nodes_pad.reshape(NR, Hp)

    h_t_p = jnp.zeros((Bp, Hp), f32).at[:B, :h_dim].set(h_t.astype(f32))

    grid = (Bp // tile_b, NR // tile_nr)     # reduction (node) axis last

    kernel = functools.partial(
        _attention_kernel, g_width=g_width, chunk=chunk, n_chunks=n_chunks)

    cost = pl.CostEstimate(
        flops=int(3 * Bp * NR * Hp + 6 * Bp * Hp * Hp),
        transcendentals=int(Bp * NR * Hp),
        bytes_accessed=int(4 * (grid[0] * NR * Hp + 2 * Bp * Hp + 3 * Hp * Hp + 3 * Hp)),
    )

    out = pl.pallas_call(
        kernel,
        out_shape=jax.ShapeDtypeStruct((Bp, Hp), f32),
        grid_spec=pltpu.PrefetchScalarGridSpec(
            num_scalar_prefetch=0,
            grid=grid,
            in_specs=[
                pl.BlockSpec((tile_b, Hp), lambda qb, nb: (qb, 0)),    # h_t
                pl.BlockSpec((tile_nr, Hp), lambda qb, nb: (nb, 0)),   # packed nodes
                pl.BlockSpec((Hp, Hp), lambda qb, nb: (0, 0)),         # W0 (resident)
                pl.BlockSpec((1, Hp), lambda qb, nb: (0, 0)),          # b0
                pl.BlockSpec((Hp, Hp), lambda qb, nb: (0, 0)),         # W1
                pl.BlockSpec((Hp, Hp), lambda qb, nb: (0, 0)),         # W2
                pl.BlockSpec((1, Hp), lambda qb, nb: (0, 0)),          # b1+b2
            ],
            out_specs=pl.BlockSpec((tile_b, Hp), lambda qb, nb: (qb, 0)),
            scratch_shapes=[
                pltpu.VMEM((tile_b, Hp), f32),   # q (packed / replicated)
                pltpu.VMEM((tile_b, Hp), f32),   # e_s accumulator (packed)
            ],
        ),
        compiler_params=pltpu.CompilerParams(
            dimension_semantics=("parallel", "arbitrary"),
        ),
        cost_estimate=cost,
    )(h_t_p, nodes_packed, prep["w0_rep"], prep["b0_rep"],
      prep["w1p"], prep["w2p"], prep["b12"])

    return out[:B, :h_dim]


def _init_params(key, h_dim):
    """Deterministic synthetic init (shapes follow nn.Linear(h_dim, h_dim))."""
    ks = jax.random.split(key, 6)

    def lin(kw, kb):
        bound = 1.0 / jnp.sqrt(h_dim)
        w = jax.random.uniform(kw, (h_dim, h_dim), jnp.float32, -bound, bound)
        b = jax.random.uniform(kb, (1, h_dim), jnp.float32, -bound, bound)
        return w, b

    p = {}
    p["w0"], p["b0"] = lin(ks[0], ks[1])
    p["w1"], p["b1"] = lin(ks[2], ks[3])
    p["w2"], p["b2"] = lin(ks[4], ks[5])
    return p


def _reference(h_nodes, h_t, p):
    """Pure-JAX reference of the same per-node compute."""
    q = h_t @ p["w0"] + p["b0"]                            # (B, H)
    w = jnp.exp(h_nodes[None, :, :] * q[:, None, :])       # (B, N, H)
    e_s = jnp.sum(h_nodes[None, :, :] * w, axis=1)         # (B, H)
    return jnp.tanh(e_s @ p["w1"] + p["b1"] + h_t @ p["w2"] + p["b2"])


if __name__ == "__main__":
    h_dim = 32      # Attention(h_dim)
    n_nodes = 20    # nodes visited by the (host-side) tree traversal
    batch = 2       # queries h_t processed per launch

    key = jax.random.PRNGKey(0)
    k_par, k_nodes, k_ht = jax.random.split(key, 3)

    params = _init_params(k_par, h_dim)
    prep = prepare_attention_params(params, h_dim)   # one-time weight prep

    h_nodes = 0.5 * jax.random.normal(k_nodes, (n_nodes, h_dim), jnp.float32)
    h_t = 0.5 * jax.random.normal(k_ht, (batch, h_dim), jnp.float32)

    e_t = attention_forward(h_nodes, h_t, prep)
    jax.block_until_ready(e_t)

    e_t_ref = _reference(h_nodes, h_t, params)
    assert e_t.shape == (batch, h_dim)
    assert jnp.allclose(e_t, e_t_ref, atol=1e-4, rtol=1e-4), "e_t mismatch"
    assert jnp.all(jnp.isfinite(e_t)), "non-finite output"

    print("KERNEL_OK")
</pallas_src>

<mosaic_0001>
module attributes {stable_mosaic.version = 11 : i64} {
  func.func @_attention_kernel(%arg0: i32, %arg1: i32, %arg2: memref<8x128xf32, #tpu.memory_space<vmem>>, %arg3: memref<8x128xf32, #tpu.memory_space<vmem>>, %arg4: memref<128x128xf32, #tpu.memory_space<vmem>>, %arg5: memref<1x128xf32, #tpu.memory_space<vmem>>, %arg6: memref<128x128xf32, #tpu.memory_space<vmem>>, %arg7: memref<128x128xf32, #tpu.memory_space<vmem>>, %arg8: memref<1x128xf32, #tpu.memory_space<vmem>>, %arg9: memref<8x128xf32, #tpu.memory_space<vmem>>, %arg10: memref<8x128xf32, #tpu.memory_space<vmem>>, %arg11: memref<8x128xf32, #tpu.memory_space<vmem>>) attributes {dimension_semantics = [#tpu.dimension_semantics<parallel>, #tpu.dimension_semantics<arbitrary>], iteration_bounds = array<i64: 1, 1>, scalar_prefetch = 0 : i64, scratch_operands = 2 : i64, tpu.core_type = #tpu.core_type<tc>, window_params = [{transform_indices = @transform_0, window_bounds = array<i64: 8, 128>}, {transform_indices = @transform_1, window_bounds = array<i64: 8, 128>}, {pipeline_mode = #tpu.pipeline_mode<synchronous>, transform_indices = @transform_2, window_bounds = array<i64: 128, 128>}, {pipeline_mode = #tpu.pipeline_mode<synchronous>, transform_indices = @transform_3, window_bounds = array<i64: 1, 128>}, {pipeline_mode = #tpu.pipeline_mode<synchronous>, transform_indices = @transform_4, window_bounds = array<i64: 128, 128>}, {pipeline_mode = #tpu.pipeline_mode<synchronous>, transform_indices = @transform_5, window_bounds = array<i64: 128, 128>}, {pipeline_mode = #tpu.pipeline_mode<synchronous>, transform_indices = @transform_6, window_bounds = array<i64: 1, 128>}, {transform_indices = @transform_7, window_bounds = array<i64: 8, 128>}]} {
    %c0_i32 = arith.constant 0 : i32
    %0 = arith.cmpi eq, %arg1, %c0_i32 : i32
    %1 = arith.extui %0 : i1 to i32
    %c0_i32_0 = arith.constant 0 : i32
    %2 = arith.cmpi ne, %1, %c0_i32_0 : i32
    scf.if %2 {
      %c0_38 = arith.constant 0 : index
      %c0_39 = arith.constant 0 : index
      %82 = vector.load %arg2[%c0_38, %c0_39] : memref<8x128xf32, #tpu.memory_space<vmem>>, vector<8x128xf32>
      %c0_40 = arith.constant 0 : index
      %c0_41 = arith.constant 0 : index
      %83 = vector.load %arg4[%c0_40, %c0_41] : memref<128x128xf32, #tpu.memory_space<vmem>>, vector<128x128xf32>
      %cst_42 = arith.constant dense<0.000000e+00> : vector<8x128xf32>
      %84 = tpu.matmul %82, %83, %cst_42 {dimension_numbers = #tpu.dot_dimension_numbers<[1], [0], [0], [1], [0, 0, 1, 1], [], []>} : vector<8x128xf32>, vector<128x128xf32>, vector<8x128xf32> -> vector<8x128xf32>
      %c0_43 = arith.constant 0 : index
      %c0_44 = arith.constant 0 : index
      %85 = vector.load %arg5[%c0_43, %c0_44] : memref<1x128xf32, #tpu.memory_space<vmem>>, vector<1x128xf32>
      %86 = vector.broadcast %85 : vector<1x128xf32> to vector<8x128xf32>
      %87 = arith.addf %84, %86 : vector<8x128xf32>
      %c0_45 = arith.constant 0 : index
      %c0_46 = arith.constant 0 : index
      %88 = vector.load %arg10[%c0_45, %c0_46] : memref<8x128xf32, #tpu.memory_space<vmem>>, vector<8x128xf32>
      tpu.vector_store %arg10[%c0_45, %c0_46], %87 {strides = array<i32>} : memref<8x128xf32, #tpu.memory_space<vmem>>, vector<8x128xf32>,
      %cst_47 = arith.constant 0.000000e+00 : f32
      %89 = vector.broadcast %cst_47 : f32 to vector<8x128xf32>
      %c0_48 = arith.constant 0 : index
      %c0_49 = arith.constant 0 : index
      %90 = vector.load %arg11[%c0_48, %c0_49] : memref<8x128xf32, #tpu.memory_space<vmem>>, vector<8x128xf32>
      tpu.vector_store %arg11[%c0_48, %c0_49], %89 {strides = array<i32>} : memref<8x128xf32, #tpu.memory_space<vmem>>, vector<8x128xf32>,
    } else {
    }
    %c0 = arith.constant 0 : index
    %c0_1 = arith.constant 0 : index
    %3 = vector.load %arg10[%c0, %c0_1] : memref<8x128xf32, #tpu.memory_space<vmem>>, vector<1x128xf32>
    %4 = vector.shape_cast %3 : vector<1x128xf32> to vector<1x128xf32>
    %5 = vector.broadcast %4 : vector<1x128xf32> to vector<8x128xf32>
    %c0_2 = arith.constant 0 : index
    %c0_3 = arith.constant 0 : index
    %6 = vector.load %arg3[%c0_2, %c0_3] : memref<8x128xf32, #tpu.memory_space<vmem>>, vector<8x128xf32>
    %7 = arith.mulf %6, %5 : vector<8x128xf32>
    %8 = math.exp %7 : vector<8x128xf32>
    %9 = arith.mulf %6, %8 : vector<8x128xf32>
    %cst = arith.constant dense<0.000000e+00> : vector<128xf32>
    %10 = vector.multi_reduction <add>, %9, %cst [0] : vector<8x128xf32> to vector<128xf32>
    %11 = vector.shape_cast %10 : vector<128xf32> to vector<1x128xf32>
    %c1 = arith.constant 1 : index
    %c0_4 = arith.constant 0 : index
    %12 = vector.load %arg10[%c1, %c0_4] : memref<8x128xf32, #tpu.memory_space<vmem>>, vector<1x128xf32>
    %13 = vector.shape_cast %12 : vector<1x128xf32> to vector<1x128xf32>
    %14 = vector.broadcast %13 : vector<1x128xf32> to vector<8x128xf32>
    %c0_5 = arith.constant 0 : index
    %c0_6 = arith.constant 0 : index
    %15 = vector.load %arg3[%c0_5, %c0_6] : memref<8x128xf32, #tpu.memory_space<vmem>>, vector<8x128xf32>
    %16 = arith.mulf %15, %14 : vector<8x128xf32>
    %17 = math.exp %16 : vector<8x128xf32>
    %18 = arith.mulf %15, %17 : vector<8x128xf32>
    %cst_7 = arith.constant dense<0.000000e+00> : vector<128xf32>
    %19 = vector.multi_reduction <add>, %18, %cst_7 [0] : vector<8x128xf32> to vector<128xf32>
    %20 = vector.shape_cast %19 : vector<128xf32> to vector<1x128xf32>
    %c2 = arith.constant 2 : index
    %c0_8 = arith.constant 0 : index
    %21 = vector.load %arg10[%c2, %c0_8] : memref<8x128xf32, #tpu.memory_space<vmem>>, vector<1x128xf32>
    %22 = vector.shape_cast %21 : vector<1x128xf32> to vector<1x128xf32>
    %23 = vector.broadcast %22 : vector<1x128xf32> to vector<8x128xf32>
    %c0_9 = arith.constant 0 : index
    %c0_10 = arith.constant 0 : index
    %24 = vector.load %arg3[%c0_9, %c0_10] : memref<8x128xf32, #tpu.memory_space<vmem>>, vector<8x128xf32>
    %25 = arith.mulf %24, %23 : vector<8x128xf32>
    %26 = math.exp %25 : vector<8x128xf32>
    %27 = arith.mulf %24, %26 : vector<8x128xf32>
    %cst_11 = arith.constant dense<0.000000e+00> : vector<128xf32>
    %28 = vector.multi_reduction <add>, %27, %cst_11 [0] : vector<8x128xf32> to vector<128xf32>
    %29 = vector.shape_cast %28 : vector<128xf32> to vector<1x128xf32>
    %c3 = arith.constant 3 : index
    %c0_12 = arith.constant 0 : index
    %30 = vector.load %arg10[%c3, %c0_12] : memref<8x128xf32, #tpu.memory_space<vmem>>, vector<1x128xf32>
    %31 = vector.shape_cast %30 : vector<1x128xf32> to vector<1x128xf32>
    %32 = vector.broadcast %31 : vector<1x128xf32> to vector<8x128xf32>
    %c0_13 = arith.constant 0 : index
    %c0_14 = arith.constant 0 : index
    %33 = vector.load %arg3[%c0_13, %c0_14] : memref<8x128xf32, #tpu.memory_space<vmem>>, vector<8x128xf32>
    %34 = arith.mulf %33, %32 : vector<8x128xf32>
    %35 = math.exp %34 : vector<8x128xf32>
    %36 = arith.mulf %33, %35 : vector<8x128xf32>
    %cst_15 = arith.constant dense<0.000000e+00> : vector<128xf32>
    %37 = vector.multi_reduction <add>, %36, %cst_15 [0] : vector<8x128xf32> to vector<128xf32>
    %38 = vector.shape_cast %37 : vector<128xf32> to vector<1x128xf32>
    %c4 = arith.constant 4 : index
    %c0_16 = arith.constant 0 : index
    %39 = vector.load %arg10[%c4, %c0_16] : memref<8x128xf32, #tpu.memory_space<vmem>>, vector<1x128xf32>
    %40 = vector.shape_cast %39 : vector<1x128xf32> to vector<1x128xf32>
    %41 = vector.broadcast %40 : vector<1x128xf32> to vector<8x128xf32>
    %c0_17 = arith.constant 0 : index
    %c0_18 = arith.constant 0 : index
    %42 = vector.load %arg3[%c0_17, %c0_18] : memref<8x128xf32, #tpu.memory_space<vmem>>, vector<8x128xf32>
    %43 = arith.mulf %42, %41 : vector<8x128xf32>
    %44 = math.exp %43 : vector<8x128xf32>
    %45 = arith.mulf %42, %44 : vector<8x128xf32>
    %cst_19 = arith.constant dense<0.000000e+00> : vector<128xf32>
    %46 = vector.multi_reduction <add>, %45, %cst_19 [0] : vector<8x128xf32> to vector<128xf32>
    %47 = vector.shape_cast %46 : vector<128xf32> to vector<1x128xf32>
    %c5 = arith.constant 5 : index
    %c0_20 = arith.constant 0 : index
    %48 = vector.load %arg10[%c5, %c0_20] : memref<8x128xf32, #tpu.memory_space<vmem>>, vector<1x128xf32>
    %49 = vector.shape_cast %48 : vector<1x128xf32> to vector<1x128xf32>
    %50 = vector.broadcast %49 : vector<1x128xf32> to vector<8x128xf32>
    %c0_21 = arith.constant 0 : index
    %c0_22 = arith.constant 0 : index
    %51 = vector.load %arg3[%c0_21, %c0_22] : memref<8x128xf32, #tpu.memory_space<vmem>>, vector<8x128xf32>
    %52 = arith.mulf %51, %50 : vector<8x128xf32>
    %53 = math.exp %52 : vector<8x128xf32>
    %54 = arith.mulf %51, %53 : vector<8x128xf32>
    %cst_23 = arith.constant dense<0.000000e+00> : vector<128xf32>
    %55 = vector.multi_reduction <add>, %54, %cst_23 [0] : vector<8x128xf32> to vector<128xf32>
    %56 = vector.shape_cast %55 : vector<128xf32> to vector<1x128xf32>
    %c6 = arith.constant 6 : index
    %c0_24 = arith.constant 0 : index
    %57 = vector.load %arg10[%c6, %c0_24] : memref<8x128xf32, #tpu.memory_space<vmem>>, vector<1x128xf32>
    %58 = vector.shape_cast %57 : vector<1x128xf32> to vector<1x128xf32>
    %59 = vector.broadcast %58 : vector<1x128xf32> to vector<8x128xf32>
    %c0_25 = arith.constant 0 : index
    %c0_26 = arith.constant 0 : index
    %60 = vector.load %arg3[%c0_25, %c0_26] : memref<8x128xf32, #tpu.memory_space<vmem>>, vector<8x128xf32>
    %61 = arith.mulf %60, %59 : vector<8x128xf32>
    %62 = math.exp %61 : vector<8x128xf32>
    %63 = arith.mulf %60, %62 : vector<8x128xf32>
    %cst_27 = arith.constant dense<0.000000e+00> : vector<128xf32>
    %64 = vector.multi_reduction <add>, %63, %cst_27 [0] : vector<8x128xf32> to vector<128xf32>
    %65 = vector.shape_cast %64 : vector<128xf32> to vector<1x128xf32>
    %c7 = arith.constant 7 : index
    %c0_28 = arith.constant 0 : index
    %66 = vector.load %arg10[%c7, %c0_28] : memref<8x128xf32, #tpu.memory_space<vmem>>, vector<1x128xf32>
    %67 = vector.shape_cast %66 : vector<1x128xf32> to vector<1x128xf32>
    %68 = vector.broadcast %67 : vector<1x128xf32> to vector<8x128xf32>
    %c0_29 = arith.constant 0 : index
    %c0_30 = arith.constant 0 : index
    %69 = vector.load %arg3[%c0_29, %c0_30] : memref<8x128xf32, #tpu.memory_space<vmem>>, vector<8x128xf32>
    %70 = arith.mulf %69, %68 : vector<8x128xf32>
    %71 = math.exp %70 : vector<8x128xf32>
    %72 = arith.mulf %69, %71 : vector<8x128xf32>
    %cst_31 = arith.constant dense<0.000000e+00> : vector<128xf32>
    %73 = vector.multi_reduction <add>, %72, %cst_31 [0] : vector<8x128xf32> to vector<128xf32>
    %74 = vector.shape_cast %73 : vector<128xf32> to vector<1x128xf32>
    %c0_32 = arith.constant 0 : index
    %c0_33 = arith.constant 0 : index
    %75 = vector.load %arg11[%c0_32, %c0_33] : memref<8x128xf32, #tpu.memory_space<vmem>>, vector<8x128xf32>
    %76 = tpu.concatenate %11, %20, %29, %38, %47, %56, %65, %74 in 0 : vector<1x128xf32>, vector<1x128xf32>, vector<1x128xf32>, vector<1x128xf32>, vector<1x128xf32>, vector<1x128xf32>, vector<1x128xf32>, vector<1x128xf32> -> vector<8x128xf32>
    %77 = arith.addf %75, %76 : vector<8x128xf32>
    %c0_34 = arith.constant 0 : index
    %c0_35 = arith.constant 0 : index
    %78 = vector.load %arg11[%c0_34, %c0_35] : memref<8x128xf32, #tpu.memory_space<vmem>>, vector<8x128xf32>
    tpu.vector_store %arg11[%c0_34, %c0_35], %77 {strides = array<i32>} : memref<8x128xf32, #tpu.memory_space<vmem>>, vector<8x128xf32>,
    %c0_i32_36 = arith.constant 0 : i32
    %79 = arith.cmpi eq, %arg1, %c0_i32_36 : i32
    %80 = arith.extui %79 : i1 to i32
    %c0_i32_37 = arith.constant 0 : i32
    %81 = arith.cmpi ne, %80, %c0_i32_37 : i32
    scf.if %81 {
      %c0_38 = arith.constant 0 : index
      %c0_39 = arith.constant 0 : index
      %82 = vector.load %arg11[%c0_38, %c0_39] : memref<8x128xf32, #tpu.memory_space<vmem>>, vector<8x128xf32>
      %c64_i32 = arith.constant 64 : i32
      %83 = tpu.dynamic_rotate %82 by %c64_i32 dim 1 : vector<8x128xf32>, i32 -> vector<8x128xf32>
      %84 = arith.addf %82, %83 : vector<8x128xf32>
      %c32_i32 = arith.constant 32 : i32
      %85 = tpu.dynamic_rotate %84 by %c32_i32 dim 1 : vector<8x128xf32>, i32 -> vector<8x128xf32>
      %86 = arith.addf %84, %85 : vector<8x128xf32>
      %c0_40 = arith.constant 0 : index
      %c0_41 = arith.constant 0 : index
      %87 = vector.load %arg6[%c0_40, %c0_41] : memref<128x128xf32, #tpu.memory_space<vmem>>, vector<128x128xf32>
      %cst_42 = arith.constant dense<0.000000e+00> : vector<8x128xf32>
      %88 = tpu.matmul %86, %87, %cst_42 {dimension_numbers = #tpu.dot_dimension_numbers<[1], [0], [0], [1], [0, 0, 1, 1], [], []>} : vector<8x128xf32>, vector<128x128xf32>, vector<8x128xf32> -> vector<8x128xf32>
      %c0_43 = arith.constant 0 : index
      %c0_44 = arith.constant 0 : index
      %89 = vector.load %arg2[%c0_43, %c0_44] : memref<8x128xf32, #tpu.memory_space<vmem>>, vector<8x128xf32>
      %c0_45 = arith.constant 0 : index
      %c0_46 = arith.constant 0 : index
      %90 = vector.load %arg7[%c0_45, %c0_46] : memref<128x128xf32, #tpu.memory_space<vmem>>, vector<128x128xf32>
      %cst_47 = arith.constant dense<0.000000e+00> : vector<8x128xf32>
      %91 = tpu.matmul %89, %90, %cst_47 {dimension_numbers = #tpu.dot_dimension_numbers<[1], [0], [0], [1], [0, 0, 1, 1], [], []>} : vector<8x128xf32>, vector<128x128xf32>, vector<8x128xf32> -> vector<8x128xf32>
      %92 = arith.addf %88, %91 : vector<8x128xf32>
      %c0_48 = arith.constant 0 : index
      %c0_49 = arith.constant 0 : index
      %93 = vector.load %arg8[%c0_48, %c0_49] : memref<1x128xf32, #tpu.memory_space<vmem>>, vector<1x128xf32>
      %94 = vector.broadcast %93 : vector<1x128xf32> to vector<8x128xf32>
      %95 = arith.addf %92, %94 : vector<8x128xf32>
      %96 = math.tanh %95 : vector<8x128xf32>
      %c0_50 = arith.constant 0 : index
      %c0_51 = arith.constant 0 : index
      %97 = vector.load %arg9[%c0_50, %c0_51] : memref<8x128xf32, #tpu.memory_space<vmem>>, vector<8x128xf32>
      tpu.vector_store %arg9[%c0_50, %c0_51], %96 {strides = array<i32>} : memref<8x128xf32, #tpu.memory_space<vmem>>, vector<8x128xf32>,
    } else {
    }
    return
  }
  func.func @transform_0(%arg0: i32, %arg1: i32) -> (i32, i32) {
    %c0_i32 = arith.constant 0 : i32
    %c0_i32_0 = arith.constant 0 : i32
    return %arg0, %c0_i32 : i32, i32
  }
  func.func @transform_1(%arg0: i32, %arg1: i32) -> (i32, i32) {
    %c0_i32 = arith.constant 0 : i32
    %c0_i32_0 = arith.constant 0 : i32
    return %arg1, %c0_i32 : i32, i32
  }
  func.func @transform_2(%arg0: i32, %arg1: i32) -> (i32, i32) {
    %c0_i32 = arith.constant 0 : i32
    %c0_i32_0 = arith.constant 0 : i32
    %c0_i32_1 = arith.constant 0 : i32
    return %c0_i32, %c0_i32_0 : i32, i32
  }
  func.func @transform_3(%arg0: i32, %arg1: i32) -> (i32, i32) {
    %c0_i32 = arith.constant 0 : i32
    %c0_i32_0 = arith.constant 0 : i32
    %c0_i32_1 = arith.constant 0 : i32
    return %c0_i32, %c0_i32_0 : i32, i32
  }
  func.func @transform_4(%arg0: i32, %arg1: i32) -> (i32, i32) {
    %c0_i32 = arith.constant 0 : i32
    %c0_i32_0 = arith.constant 0 : i32
    %c0_i32_1 = arith.constant 0 : i32
    return %c0_i32, %c0_i32_0 : i32, i32
  }
  func.func @transform_5(%arg0: i32, %arg1: i32) -> (i32, i32) {
    %c0_i32 = arith.constant 0 : i32
    %c0_i32_0 = arith.constant 0 : i32
    %c0_i32_1 = arith.constant 0 : i32
    return %c0_i32, %c0_i32_0 : i32, i32
  }
  func.func @transform_6(%arg0: i32, %arg1: i32) -> (i32, i32) {
    %c0_i32 = arith.constant 0 : i32
    %c0_i32_0 = arith.constant 0 : i32
    %c0_i32_1 = arith.constant 0 : i32
    return %c0_i32, %c0_i32_0 : i32, i32
  }
  func.func @transform_7(%arg0: i32, %arg1: i32) -> (i32, i32) {
    %c0_i32 = arith.constant 0 : i32
    %c0_i32_0 = arith.constant 0 : i32
    return %arg0, %c0_i32 : i32, i32
  }
}

</mosaic_0001>

<llo_original>
// kernel: tpu_custom_call.1
$region0: #{tpu_custom_call.1}
  #allocation0 [shape = 'u32[]', space=smem, size = 0x4, offset = 0x4, fixed_abs, tag = 'smem constant byte address 0x4 - core index']
  #allocation1 [shape = 'u32[72,128]{1,0:T(1,128)}', space=vmem, size = 0x9000, scoped, tag = 'internal scratch']
  #allocation2 [shape = 'f32[8,128]{1,0:T(8,128)}', space=vmem, size = 0x1000, scoped, tag = 'scratch operand']
  #allocation3 [shape = 'f32[8,128]{1,0:T(8,128)}', space=vmem, size = 0x1000, scoped, tag = 'scratch operand']
  %s0 = inlined_call_operand.hbm [shape: f32[8,128], index: 0, kind: input, shape index: {}]
  %s1 = inlined_call_operand.hbm [shape: f32[8,128], index: 1, kind: input, shape index: {}]
  %s2 = inlined_call_operand.hbm [shape: f32[128,128], index: 2, kind: input, shape index: {}]
  %s3 = inlined_call_operand.vmem [shape: f32[1,128], index: 3, kind: input, shape index: {}]
  %s4 = inlined_call_operand.hbm [shape: f32[128,128], index: 4, kind: input, shape index: {}]
  %s5 = inlined_call_operand.hbm [shape: f32[128,128], index: 5, kind: input, shape index: {}]
  %s6 = inlined_call_operand.vmem [shape: f32[1,128], index: 6, kind: input, shape index: {}]
  %s7 = inlined_call_operand.hbm [shape: f32[8,128], index: 7, kind: output, shape index: {}]
  %s8 = sld [smem:[#allocation0]]
  $region66: #{tpu_custom_call.1} parent=0
    _
  %s10 = ssub.s32 1, %s8
  %s11 = scalar_select 0, %s10, %s8
  $region1: #{tpu_custom_call.1} parent=0
    #allocation4 [shape = 'u8[4096]{0}', space=vmem, size = 0x1000, scoped, tag = 'input window, operand 0, single buffered']
    #allocation5 [shape = 's32[1]{0}', space=sflag, size = 0x4, scoped, tag = 'scoped memory for tpu_custom_call.1']
    #allocation6 [shape = 's32[1]{0}', space=sflag, size = 0x4, scoped, tag = 'scoped memory for tpu_custom_call.1']
    #allocation7 [shape = 'u8[4096]{0}', space=vmem, size = 0x1000, scoped, tag = 'input window, operand 1, single buffered']
    #allocation8 [shape = 's32[1]{0}', space=sflag, size = 0x4, scoped, tag = 'scoped memory for tpu_custom_call.1']
    #allocation9 [shape = 'u8[65536]{0}', space=vmem, size = 0x10000, scoped, tag = 'input window, operand 2, single buffered']
    #allocation10 [shape = 'u8[65536]{0}', space=vmem, size = 0x10000, scoped, tag = 'input window, operand 4, single buffered']
    #allocation11 [shape = 's32[1]{0}', space=sflag, size = 0x4, scoped, tag = 'scoped memory for tpu_custom_call.1']
    #allocation12 [shape = 'u8[65536]{0}', space=vmem, size = 0x10000, scoped, tag = 'input window, operand 5, single buffered']
    #allocation13 [shape = 'u8[4096]{0}', space=vmem, size = 0x1000, scoped, tag = 'output window, operand 0, single buffered']
    %12 = vsyncpa [#allocation5], 0
    %13 = vsyncpa [#allocation8], 0
    %14 = vsyncpa [#allocation11], 0
    %15 = vsyncpa [#allocation6], 0
    // Predicated region
    $region2: #{tpu_custom_call.1} parent=1 // pred_check
      _
    $region3: #{tpu_custom_call.1} parent=1 // pred_check_branch
      %17 = sbr.rel (0) target = $region5
    $region4: #{tpu_custom_call.1} parent=1 // pred_region
      %19 = vsyncadd [#allocation5], 0
      %s21 = sshll.u32 %s0, 4
      %s22 = int_to_ptr.hbm [resolvable:$true] %s21
      %s23 = sshll.u32 [#allocation4], 4
      %s24 = int_to_ptr.vmem [resolvable:$true] %s23
      %26 = dma.hbm_to_vmem [thread:$0]  %s22, 128, %s24, [#allocation5]
    $region5: #{tpu_custom_call.1} parent=1 // pred_fallthru
      _
    // Predicated region
    $region6: #{tpu_custom_call.1} parent=1 // pred_check
      _
    $region7: #{tpu_custom_call.1} parent=1 // pred_check_branch
      %28 = sbr.rel (0) target = $region9
    $region8: #{tpu_custom_call.1} parent=1 // pred_region
      %30 = vsyncadd [#allocation8], 0
      %s32 = sshll.u32 %s1, 4
      %s33 = int_to_ptr.hbm [resolvable:$true] %s32
      %s34 = sshll.u32 [#allocation7], 4
      %s35 = int_to_ptr.vmem [resolvable:$true] %s34
      %37 = dma.hbm_to_vmem [thread:$0]  %s33, 128, %s35, [#allocation8]
    $region9: #{tpu_custom_call.1} parent=1 // pred_fallthru
      _
    // Predicated region
    $region10: #{tpu_custom_call.1} parent=1 // pred_check
      _
    $region11: #{tpu_custom_call.1} parent=1 // pred_check_branch
      %39 = sbr.rel (0) target = $region13
    $region12: #{tpu_custom_call.1} parent=1 // pred_region
      %41 = vsyncadd [#allocation8], 0
      %s42 = sshll.u32 %s2, 4
      %s43 = int_to_ptr.hbm [resolvable:$true] %s42
      %s44 = sshll.u32 [#allocation9], 4
      %s45 = int_to_ptr.vmem [resolvable:$true] %s44
      %50 = dma.hbm_to_vmem [thread:$0]  %s43, 2048, %s45, [#allocation8], 128, 128, 8
    $region13: #{tpu_custom_call.1} parent=1 // pred_fallthru
      _
    // Predicated region
    $region14: #{tpu_custom_call.1} parent=1 // pred_check
      _
    $region15: #{tpu_custom_call.1} parent=1 // pred_check_branch
      %52 = sbr.rel (0) target = $region17
    $region16: #{tpu_custom_call.1} parent=1 // pred_region
      _
    $region17: #{tpu_custom_call.1} parent=1 // pred_fallthru
      _
    // Predicated region
    $region18: #{tpu_custom_call.1} parent=1 // pred_check
      _
    $region19: #{tpu_custom_call.1} parent=1 // pred_check_branch
      %54 = sbr.rel (0) target = $region21
    $region20: #{tpu_custom_call.1} parent=1 // pred_region
      %56 = vsyncadd [#allocation11], 0
      %s57 = sshll.u32 %s4, 4
      %s58 = int_to_ptr.hbm [resolvable:$true] %s57
      %s59 = sshll.u32 [#allocation10], 4
      %s60 = int_to_ptr.vmem [resolvable:$true] %s59
      %65 = dma.hbm_to_vmem [thread:$0]  %s58, 2048, %s60, [#allocation11], 128, 128, 8
    $region21: #{tpu_custom_call.1} parent=1 // pred_fallthru
      _
    // Predicated region
    $region22: #{tpu_custom_call.1} parent=1 // pred_check
      _
    $region23: #{tpu_custom_call.1} parent=1 // pred_check_branch
      %67 = sbr.rel (0) target = $region25
    $region24: #{tpu_custom_call.1} parent=1 // pred_region
      %69 = vsyncadd [#allocation11], 0
      %s70 = sshll.u32 %s5, 4
      %s71 = int_to_ptr.hbm [resolvable:$true] %s70
      %s72 = sshll.u32 [#allocation12], 4
      %s73 = int_to_ptr.vmem [resolvable:$true] %s72
      %78 = dma.hbm_to_vmem [thread:$0]  %s71, 2048, %s73, [#allocation11], 128, 128, 8
    $region25: #{tpu_custom_call.1} parent=1 // pred_fallthru
      _
    // Predicated region
    $region26: #{tpu_custom_call.1} parent=1 // pred_check
      _
    $region27: #{tpu_custom_call.1} parent=1 // pred_check_branch
      %80 = sbr.rel (0) target = $region29
    $region28: #{tpu_custom_call.1} parent=1 // pred_region
      _
    $region29: #{tpu_custom_call.1} parent=1 // pred_fallthru
      _
    // Predicated region
    $region30: #{tpu_custom_call.1} parent=1 // pred_check
      _
    $region31: #{tpu_custom_call.1} parent=1 // pred_check_branch
      %82 = sbr.rel (0) target = $region33
    $region32: #{tpu_custom_call.1} parent=1 // pred_region
      %84 = dma.done [#allocation5], 128
    $region33: #{tpu_custom_call.1} parent=1 // pred_fallthru
      _
    // Predicated region
    $region34: #{tpu_custom_call.1} parent=1 // pred_check
      _
    $region35: #{tpu_custom_call.1} parent=1 // pred_check_branch
      %86 = sbr.rel (0) target = $region37
    $region36: #{tpu_custom_call.1} parent=1 // pred_region
      %88 = dma.done [#allocation8], 128
    $region37: #{tpu_custom_call.1} parent=1 // pred_fallthru
      _
    // Predicated region
    $region38: #{tpu_custom_call.1} parent=1 // pred_check
      _
    $region39: #{tpu_custom_call.1} parent=1 // pred_check_branch
      %90 = sbr.rel (0) target = $region41
    $region40: #{tpu_custom_call.1} parent=1 // pred_region
      %92 = dma.done [#allocation8], 2048
    $region41: #{tpu_custom_call.1} parent=1 // pred_fallthru
      _
    // Predicated region
    $region42: #{tpu_custom_call.1} parent=1 // pred_check
      _
    $region43: #{tpu_custom_call.1} parent=1 // pred_check_branch
      %94 = sbr.rel (0) target = $region45
    $region44: #{tpu_custom_call.1} parent=1 // pred_region
      %96 = dma.done [#allocation11], 2048
    $region45: #{tpu_custom_call.1} parent=1 // pred_fallthru
      _
    // Predicated region
    $region46: #{tpu_custom_call.1} parent=1 // pred_check
      _
    $region47: #{tpu_custom_call.1} parent=1 // pred_check_branch
      %98 = sbr.rel (0) target = $region49
    $region48: #{tpu_custom_call.1} parent=1 // pred_region
      %100 = dma.done [#allocation11], 2048
    $region49: #{tpu_custom_call.1} parent=1 // pred_fallthru
      _
    %p101 = scmp.eq.s32.totalorder 0, 0
    // Predicated region
    $region50: #{tpu_custom_call.1} parent=1 // pred_check
      %p102 = pneg %p101
    $region51: #{tpu_custom_call.1} parent=1 // pred_check_branch
      %104 = sbr.rel (%p102) target = $region53
    $region52: #{tpu_custom_call.1} parent=1 // pred_region
      %v105 = vld [vmem:[#allocation4] sm:$0xff]
      %v106 = vld [vmem:[#allocation9] sm:$0xff]
      %v107 = vld [vmem:[#allocation9 + $0x8] sm:$0xff]
      %v108 = vld [vmem:[#allocation9 + $0x10] sm:$0xff]
      %v109 = vld [vmem:[#allocation9 + $0x18] sm:$0xff]
      %v110 = vld [vmem:[#allocation9 + $0x20] sm:$0xff]
      %v111 = vld [vmem:[#allocation9 + $0x28] sm:$0xff]
      %v112 = vld [vmem:[#allocation9 + $0x30] sm:$0xff]
      %v113 = vld [vmem:[#allocation9 + $0x38] sm:$0xff]
      %v114 = vld [vmem:[#allocation9 + $0x40] sm:$0xff]
      %v115 = vld [vmem:[#allocation9 + $0x48] sm:$0xff]
      %v116 = vld [vmem:[#allocation9 + $0x50] sm:$0xff]
      %v117 = vld [vmem:[#allocation9 + $0x58] sm:$0xff]
      %v118 = vld [vmem:[#allocation9 + $0x60] sm:$0xff]
      %v119 = vld [vmem:[#allocation9 + $0x68] sm:$0xff]
      %v120 = vld [vmem:[#allocation9 + $0x70] sm:$0xff]
      %v121 = vld [vmem:[#allocation9 + $0x78] sm:$0xff]
      %v122 = vld [vmem:[%s3] sm:$0x1]
      %v124 = vperm.slane %v122, 0
      %126 = vmatpush.msra.mxu0 %v121
      %127 = vmatpush.msra.mxu0 %v120
      %128 = vmatpush.msra.mxu0 %v119
      %129 = vmatpush.msra.mxu0 %v118
      %130 = vmatpush.msra.mxu0 %v117
      %131 = vmatpush.msra.mxu0 %v116
      %132 = vmatpush.msra.mxu0 %v115
      %133 = vmatpush.msra.mxu0 %v114
      %134 = vmatpush.msra.mxu0 %v113
      %135 = vmatpush.msra.mxu0 %v112
      %136 = vmatpush.msra.mxu0 %v111
      %137 = vmatpush.msra.mxu0 %v110
      %138 = vmatpush.msra.mxu0 %v109
      %139 = vmatpush.msra.mxu0 %v108
      %140 = vmatpush.msra.mxu0 %v107
      %141 = vmatpush.msra.mxu0 %v106
      %142 = vmatmul.f32.gmra.mxu0 %v105
      %v143 = vpop.f32.mrf.mxu0
      %v144 = vadd.f32 %v124, %v143
      %145 = vdwg.mxu0
      %146 = vst [vmem:[#allocation2] sm:$0xff] %v144
      %147 = vst [vmem:[#allocation3] sm:$0xff] 0.0
    $region53: #{tpu_custom_call.1} parent=1 // pred_fallthru
      _
    %v148 = vld [vmem:[#allocation2] sm:$0x1]
    %v149 = vperm.slane %v148, 0
    %v150 = vld [vmem:[#allocation7] sm:$0xff]
    %v151 = vmul.f32 %v150, %v149
    %v152 = vmul.f32 %v151, 1.442695
    %v153 = vpow.pop %v152
    %v154 = vmul.f32 %v150, %v153
    %v155 = vrot.slane %v154, 4
    %v156 = vadd.f32 %v154, %v155
    %v157 = vrot.slane %v156, 2
    %v158 = vadd.f32 %v156, %v157
    %v159 = vrot.slane %v158, 1
    %v160 = vadd.f32 %v158, %v159
    %v161 = vld [vmem:[#allocation2 + $0x1] sm:$0x1]
    %v162 = vperm.slane %v161, 0
    %v163 = vmul.f32 %v150, %v162
    %v164 = vmul.f32 %v163, 1.442695
    %v165 = vpow.pop %v164
    %v166 = vmul.f32 %v150, %v165
    %v167 = vrot.slane %v166, 4
    %v168 = vadd.f32 %v166, %v167
    %v169 = vrot.slane %v168, 2
    %v170 = vadd.f32 %v168, %v169
    %v171 = vrot.slane %v170, 1
    %v172 = vadd.f32 %v170, %v171
    %v173 = vld [vmem:[#allocation2 + $0x2] sm:$0x1]
    %v174 = vperm.slane %v173, 0
    %v175 = vmul.f32 %v150, %v174
    %v176 = vmul.f32 %v175, 1.442695
    %v177 = vpow.pop %v176
    %v178 = vmul.f32 %v150, %v177
    %v179 = vrot.slane %v178, 4
    %v180 = vadd.f32 %v178, %v179
    %v181 = vrot.slane %v180, 2
    %v182 = vadd.f32 %v180, %v181
    %v183 = vrot.slane %v182, 1
    %v184 = vadd.f32 %v182, %v183
    %v185 = vld [vmem:[#allocation2 + $0x3] sm:$0x1]
    %v186 = vperm.slane %v185, 0
    %v187 = vmul.f32 %v150, %v186
    %v188 = vmul.f32 %v187, 1.442695
    %v189 = vpow.pop %v188
    %v190 = vmul.f32 %v150, %v189
    %v191 = vrot.slane %v190, 4
    %v192 = vadd.f32 %v190, %v191
    %v193 = vrot.slane %v192, 2
    %v194 = vadd.f32 %v192, %v193
    %v195 = vrot.slane %v194, 1
    %v196 = vadd.f32 %v194, %v195
    %v197 = vld [vmem:[#allocation2 + $0x4] sm:$0x1]
    %v198 = vperm.slane %v197, 0
    %v199 = vmul.f32 %v150, %v198
    %v200 = vmul.f32 %v199, 1.442695
    %v201 = vpow.pop %v200
    %v202 = vmul.f32 %v150, %v201
    %v203 = vrot.slane %v202, 4
    %v204 = vadd.f32 %v202, %v203
    %v205 = vrot.slane %v204, 2
    %v206 = vadd.f32 %v204, %v205
    %v207 = vrot.slane %v206, 1
    %v208 = vadd.f32 %v206, %v207
    %v209 = vld [vmem:[#allocation2 + $0x5] sm:$0x1]
    %v210 = vperm.slane %v209, 0
    %v211 = vmul.f32 %v150, %v210
    %v212 = vmul.f32 %v211, 1.442695
    %v213 = vpow.pop %v212
    %v214 = vmul.f32 %v150, %v213
    %v215 = vrot.slane %v214, 4
    %v216 = vadd.f32 %v214, %v215
    %v217 = vrot.slane %v216, 2
    %v218 = vadd.f32 %v216, %v217
    %v219 = vrot.slane %v218, 1
    %v220 = vadd.f32 %v218, %v219
    %v221 = vld [vmem:[#allocation2 + $0x6] sm:$0x1]
    %v222 = vperm.slane %v221, 0
    %v223 = vmul.f32 %v150, %v222
    %v224 = vmul.f32 %v223, 1.442695
    %v225 = vpow.pop %v224
    %v226 = vmul.f32 %v150, %v225
    %v227 = vrot.slane %v226, 4
    %v228 = vadd.f32 %v226, %v227
    %v229 = vrot.slane %v228, 2
    %v230 = vadd.f32 %v228, %v229
    %v231 = vrot.slane %v230, 1
    %v232 = vadd.f32 %v230, %v231
    %v233 = vld [vmem:[#allocation2 + $0x7] sm:$0x1]
    %v234 = vperm.slane %v233, 0
    %v235 = vmul.f32 %v150, %v234
    %v236 = vmul.f32 %v235, 1.442695
    %v237 = vpow.pop %v236
    %v238 = vmul.f32 %v150, %v237
    %v239 = vrot.slane %v238, 4
    %v240 = vadd.f32 %v238, %v239
    %v241 = vrot.slane %v240, 2
    %v242 = vadd.f32 %v240, %v241
    %v243 = vrot.slane %v242, 1
    %v244 = vadd.f32 %v242, %v243
    %v245 = vld [vmem:[#allocation3] sm:$0xff]
    %vm246 = vcmask 1040384
    %v247 = vsel %vm246, %v160, %v172
    %vm248 = vcmask 1041408
    %v249 = vsel %vm248, %v247, %v184
    %vm250 = vcmask 1042432
    %v251 = vsel %vm250, %v249, %v196
    %vm252 = vcmask 1043456
    %v253 = vsel %vm252, %v251, %v208
    %vm254 = vcmask 1044480
    %v255 = vsel %vm254, %v253, %v220
    %vm256 = vcmask 1045504
    %v257 = vsel %vm256, %v255, %v232
    %vm258 = vcmask 1046528
    %v259 = vsel %vm258, %v257, %v244
    %v260 = vadd.f32 %v245, %v259
    %261 = vst [vmem:[#allocation3] sm:$0xff] %v260
    // Predicated region
    $region54: #{tpu_custom_call.1} parent=1 // pred_check
      %p262 = pneg %p101
    $region55: #{tpu_custom_call.1} parent=1 // pred_check_branch
      %264 = sbr.rel (%p262) target = $region57
    $region56: #{tpu_custom_call.1} parent=1 // pred_region
      %v265 = vld [vmem:[#allocation3] sm:$0xff]
      %266 = vrot.lane.b32.xlu0 %v265, 64
      %v267 = vpop.permute.xlu0 %266
      %v268 = vadd.f32 %v265, %v267
      %269 = vrot.lane.b32.xlu0 %v268, 32
      %v270 = vpop.permute.xlu0 %269
      %v271 = vadd.f32 %v268, %v270
      %v272 = vld [vmem:[#allocation10] sm:$0xff]
      %v273 = vld [vmem:[#allocation10 + $0x8] sm:$0xff]
      %v274 = vld [vmem:[#allocation10 + $0x10] sm:$0xff]
      %v275 = vld [vmem:[#allocation10 + $0x18] sm:$0xff]
      %v276 = vld [vmem:[#allocation10 + $0x20] sm:$0xff]
      %v277 = vld [vmem:[#allocation10 + $0x28] sm:$0xff]
      %v278 = vld [vmem:[#allocation10 + $0x30] sm:$0xff]
      %v279 = vld [vmem:[#allocation10 + $0x38] sm:$0xff]
      %v280 = vld [vmem:[#allocation10 + $0x40] sm:$0xff]
      %v281 = vld [vmem:[#allocation10 + $0x48] sm:$0xff]
      %v282 = vld [vmem:[#allocation10 + $0x50] sm:$0xff]
      %v283 = vld [vmem:[#allocation10 + $0x58] sm:$0xff]
      %v284 = vld [vmem:[#allocation10 + $0x60] sm:$0xff]
      %v285 = vld [vmem:[#allocation10 + $0x68] sm:$0xff]
      %v286 = vld [vmem:[#allocation10 + $0x70] sm:$0xff]
      %v287 = vld [vmem:[#allocation10 + $0x78] sm:$0xff]
      %v288 = vld [vmem:[#allocation4] sm:$0xff]
      %v289 = vld [vmem:[#allocation12] sm:$0xff]
      %v290 = vld [vmem:[#allocation12 + $0x8] sm:$0xff]
      %v291 = vld [vmem:[#allocation12 + $0x10] sm:$0xff]
      %v292 = vld [vmem:[#allocation12 + $0x18] sm:$0xff]
      %v293 = vld [vmem:[#allocation12 + $0x20] sm:$0xff]
      %v294 = vld [vmem:[#allocation12 + $0x28] sm:$0xff]
      %v295 = vld [vmem:[#allocation12 + $0x30] sm:$0xff]
      %v296 = vld [vmem:[#allocation12 + $0x38] sm:$0xff]
      %v297 = vld [vmem:[#allocation12 + $0x40] sm:$0xff]
      %v298 = vld [vmem:[#allocation12 + $0x48] sm:$0xff]
      %v299 = vld [vmem:[#allocation12 + $0x50] sm:$0xff]
      %v300 = vld [vmem:[#allocation12 + $0x58] sm:$0xff]
      %v301 = vld [vmem:[#allocation12 + $0x60] sm:$0xff]
      %v302 = vld [vmem:[#allocation12 + $0x68] sm:$0xff]
      %v303 = vld [vmem:[#allocation12 + $0x70] sm:$0xff]
      %v304 = vld [vmem:[#allocation12 + $0x78] sm:$0xff]
      %305 = vmatpush.msra.mxu0 %v304
      %306 = vmatpush.msra.mxu0 %v303
      %307 = vmatpush.msra.mxu0 %v302
      %308 = vmatpush.msra.mxu0 %v301
      %309 = vmatpush.msra.mxu0 %v300
      %310 = vmatpush.msra.mxu0 %v299
      %311 = vmatpush.msra.mxu0 %v298
      %312 = vmatpush.msra.mxu0 %v297
      %313 = vmatpush.msra.mxu0 %v296
      %314 = vmatpush.msra.mxu0 %v295
      %315 = vmatpush.msra.mxu0 %v294
      %316 = vmatpush.msra.mxu0 %v293
      %317 = vmatpush.msra.mxu0 %v292
      %318 = vmatpush.msra.mxu0 %v291
      %319 = vmatpush.msra.mxu0 %v290
      %320 = vmatpush.msra.mxu0 %v289
      %321 = vmatmul.f32.gmra.mxu0 %v288
      %v322 = vpop.f32.mrf.mxu0
      %v323 = vadd.f32 0.0, %v322
      %324 = vdwg.mxu0
      %325 = vmatpush.msra.mxu0 %v287
      %326 = vmatpush.msra.mxu0 %v286
      %327 = vmatpush.msra.mxu0 %v285
      %328 = vmatpush.msra.mxu0 %v284
      %329 = vmatpush.msra.mxu0 %v283
      %330 = vmatpush.msra.mxu0 %v282
      %331 = vmatpush.msra.mxu0 %v281
      %332 = vmatpush.msra.mxu0 %v280
      %333 = vmatpush.msra.mxu0 %v279
      %334 = vmatpush.msra.mxu0 %v278
      %335 = vmatpush.msra.mxu0 %v277
      %336 = vmatpush.msra.mxu0 %v276
      %337 = vmatpush.msra.mxu0 %v275
      %338 = vmatpush.msra.mxu0 %v274
      %339 = vmatpush.msra.mxu0 %v273
      %340 = vmatpush.msra.mxu0 %v272
      %341 = vmatmul.f32.gmra.mxu0 %v271
      %v342 = vpop.f32.mrf.mxu0
      %v343 = vadd.f32 %v323, %v342
      %344 = vdwg.mxu0
      %v345 = vld [vmem:[%s6] sm:$0x1]
      %v347 = vperm.slane %v345, 0
      %v349 = vadd.f32 %v343, %v347
      %v350 = vtanh.pop %v349
      %351 = vst [vmem:[#allocation13] sm:$0xff] %v350
    $region57: #{tpu_custom_call.1} parent=1 // pred_fallthru
      _
    // Predicated region
    $region58: #{tpu_custom_call.1} parent=1 // pred_check
      _
    $region59: #{tpu_custom_call.1} parent=1 // pred_check_branch
      %353 = sbr.rel (0) target = $region61
    $region60: #{tpu_custom_call.1} parent=1 // pred_region
      %355 = vsyncadd [#allocation6], 0
      %s357 = sshll.u32 [#allocation13], 4
      %s358 = int_to_ptr.vmem [resolvable:$true] %s357
      %s359 = sshll.u32 %s7, 4
      %s360 = int_to_ptr.hbm [resolvable:$true] %s359
      %362 = dma.vmem_to_hbm [thread:$0]  %s358, 128, %s360, [#allocation6]
    $region61: #{tpu_custom_call.1} parent=1 // pred_fallthru
      _
    // Predicated region
    $region62: #{tpu_custom_call.1} parent=1 // pred_check
      _
    $region63: #{tpu_custom_call.1} parent=1 // pred_check_branch
      %364 = sbr.rel (0) target = $region65
    $region64: #{tpu_custom_call.1} parent=1 // pred_region
      %366 = dma.done [#allocation6], 128
    $region65: #{tpu_custom_call.1} parent=1 // pred_fallthru
      _
    %367 = vsyncpa [#allocation5], 1
    %368 = vsyncpa [#allocation8], 1
    %369 = vsyncpa [#allocation11], 1
    %370 = vsyncpa [#allocation6], 1

</llo_original>
